<compile_context>
chip_gen: v7x
topology: tpu7x:2x2x1
jax: 0.10.0
libtpu: 0.0.40
codegen_flags: <defaults>
</compile_context>

<pallas_src>
import functools
import math

import jax
import jax.numpy as jnp
from jax.experimental import pallas as pl
from jax.experimental.pallas import tpu as pltpu


def _round_up(x, m):
    return ((x + m - 1) // m) * m


# ---------------------------------------------------------------------------
# Kernel body
# ---------------------------------------------------------------------------
def _mmp_kernel(c_ref, pose_ref, prec_ref, out_ref, *,
                loss_weight, num_gaussians, d_pad):
    """Per-sample min-over-gaussians NLL for one (TB, Dp) pose tile.

    With pose_aug = [x, 1, 0...] (homogeneous lane at index D) and
      A_m[:D,:D] = 0.5*P_m,  A_m[:D,D] = -(P_m @ mu_m),
      c_m        = 0.5*mu_m^T P_m mu_m - log(nll_w_m)           (f32, SMEM)
    we have  pose_aug @ A_m @ pose_aug + c_m
           = 0.5*(x-mu_m)^T P_m (x-mu_m) - log(nll_w_m).
    All M augmented matrices are concatenated along output lanes, so one
    (TB,Dp)@(Dp,M*Dp) MXU matmul covers every gaussian.
    """
    pose = pose_ref[...]                                            # (TB, Dp)
    t = jnp.dot(pose, prec_ref[...],
                preferred_element_type=jnp.float32)                 # (TB, M*Dp)  MXU
    pose_f32 = pose.astype(jnp.float32)

    min_q = None
    for m in range(num_gaussians):                                  # static; M small (8)
        q = jnp.sum(t[:, m * d_pad:(m + 1) * d_pad] * pose_f32,
                    axis=-1, keepdims=True) + c_ref[m]              # (TB, 1)
        min_q = q if min_q is None else jnp.minimum(min_q, q)

    out_ref[...] = (jnp.float32(loss_weight) * min_q).astype(out_ref.dtype)


# ---------------------------------------------------------------------------
# Wrapper (mirrors MaxMixturePrior.forward with use_merged=True)
# ---------------------------------------------------------------------------
def max_mixture_prior_loss(body_pose, means, precisions, nll_weights,
                           loss_weight=1.0, reduction='mean',
                           loss_weight_override=None, reduction_override=None,
                           tile_b=1024, mxu_dtype=jnp.float32):
    assert reduction_override in (None, 'none', 'mean', 'sum')
    assert reduction in (None, 'none', 'mean', 'sum')
    red = reduction_override if reduction_override else reduction
    w = loss_weight_override if loss_weight_override is not None else loss_weight

    body_pose = jnp.asarray(body_pose)
    B, D = body_pose.shape
    M = means.shape[0]

    # Lane-dense layout: features (+1 homogeneous lane) padded to 128 lanes,
    # batch padded to the tile.  Padded lanes / rows contribute exactly zero
    # and padded batch rows are sliced away in the wrapper.
    D_pad = _round_up(D + 1, 128)
    TB = min(_round_up(B, 8), _round_up(tile_b, 8))
    B_pad = _round_up(B, TB)
    nb = B_pad // TB

    pose_p = jnp.zeros((B_pad, D_pad), jnp.float32)
    pose_p = pose_p.at[:B, :D].set(body_pose.astype(jnp.float32))
    pose_p = pose_p.at[:, D].set(1.0)                 # homogeneous coordinate
    pose_p = pose_p.astype(mxu_dtype)

    P = jnp.asarray(precisions).astype(jnp.float32)   # (M, D, D)
    mu = jnp.asarray(means).astype(jnp.float32)       # (M, D)
    Pmu = jnp.einsum('mij,mj->mi', P, mu)             # (M, D)

    # Augmented precision blocks, concatenated along output lanes: (Dp, M*Dp).
    A = jnp.zeros((M, D_pad, D_pad), jnp.float32)
    A = A.at[:, :D, :D].set(0.5 * P)
    A = A.at[:, :D, D].set(-Pmu)
    prec_aug = jnp.transpose(A, (1, 0, 2)).reshape(D_pad, M * D_pad).astype(mxu_dtype)

    # Per-gaussian scalar constants stay in f32 SMEM.
    c = (0.5 * jnp.einsum('mi,mi->m', mu, Pmu)
         - jnp.log(jnp.asarray(nll_weights).astype(jnp.float32).reshape(M)))

    out = pl.pallas_call(
        functools.partial(_mmp_kernel, loss_weight=w,
                          num_gaussians=M, d_pad=D_pad),
        out_shape=jax.ShapeDtypeStruct((B_pad, 1), jnp.float32),
        grid_spec=pl.GridSpec(
            grid=(nb,),
            in_specs=[
                pl.BlockSpec(memory_space=pltpu.MemorySpace.SMEM),     # c (M,)
                pl.BlockSpec((TB, D_pad), lambda i: (i, 0)),           # pose tile
                pl.BlockSpec((D_pad, M * D_pad), lambda i: (0, 0)),    # merged precisions
            ],
            out_specs=pl.BlockSpec((TB, 1), lambda i: (i, 0)),
        ),
        compiler_params=pltpu.CompilerParams(
            dimension_semantics=("parallel",)),
    )(c, pose_p, prec_aug)

    # All reductions are wrapper-side (keeps the grid fully parallel; on v7x
    # both TensorCores can share the batch).  Padded rows are simply sliced off.
    per_sample = out[:B, 0]
    if red in (None, 'none'):
        return per_sample.astype(body_pose.dtype)
    if red == 'sum':
        return jnp.sum(per_sample).astype(body_pose.dtype)
    return jnp.mean(per_sample).astype(body_pose.dtype)


# ---------------------------------------------------------------------------
# Plain-JAX reference (merged_log_likelihood)
# ---------------------------------------------------------------------------
def _reference_merged_nll(pose, means, precisions, nll_weights):
    diff = pose[:, None, :] - means[None, :, :]                    # (B,M,D)
    prec_diff = jnp.einsum('mij,bmj->bmi', precisions, diff,
                           precision='highest')
    quad = jnp.sum(prec_diff * diff, axis=-1)                      # (B,M)
    curr = 0.5 * quad - jnp.log(nll_weights)                       # (B,M)
    return jnp.min(curr, axis=1)                                   # (B,)


# ---------------------------------------------------------------------------
# Demo / self-test
# ---------------------------------------------------------------------------
if __name__ == "__main__":
    key = jax.random.PRNGKey(0)
    B, D, M = 6, 69, 8                      # SMPL body pose: 23 joints * 3 = 69
    k1, k2, k3, k4, k5 = jax.random.split(key, 5)

    body_pose = 0.3 * jax.random.normal(k1, (B, D), dtype=jnp.float32)
    means = 0.2 * jax.random.normal(k2, (M, D), dtype=jnp.float32)

    # Synthetic (deterministic) GMM parameters, constructed the way the module
    # derives them from its covariances (the real ones come from gmm_08.pkl).
    A = jax.random.normal(k3, (M, D, D), dtype=jnp.float32)
    covs = 0.1 * jnp.einsum('mij,mkj->mik', A, A) / D + 0.9 * jnp.eye(D, dtype=jnp.float32)
    precisions = jnp.linalg.inv(covs)
    raw_w = jax.random.uniform(k4, (M,), dtype=jnp.float32) + 0.1
    weights = raw_w / jnp.sum(raw_w)
    sqrdets = jnp.sqrt(jnp.linalg.det(covs))
    const = (2.0 * math.pi) ** (D / 2.0)
    nll_weights = (weights / (const * (sqrdets / jnp.min(sqrdets))))[None, :]   # (1, M)

    loss_weight = 1.0
    ref = loss_weight * _reference_merged_nll(body_pose, means, precisions, nll_weights)

    # f32 MXU path (default): reference-grade accuracy.
    loss_none = max_mixture_prior_loss(body_pose, means, precisions, nll_weights,
                                       loss_weight=loss_weight, reduction='none')
    loss_sum = max_mixture_prior_loss(body_pose, means, precisions, nll_weights,
                                      loss_weight=loss_weight, reduction='sum')
    loss_mean = max_mixture_prior_loss(body_pose, means, precisions, nll_weights,
                                       loss_weight=loss_weight, reduction='mean')
    jax.block_until_ready((loss_none, loss_sum, loss_mean))

    assert loss_none.shape == (B,)
    assert loss_sum.shape == () and loss_mean.shape == ()
    assert jnp.allclose(loss_none, ref, rtol=1e-3, atol=1e-2)
    assert jnp.allclose(loss_sum, jnp.sum(ref), rtol=1e-3, atol=1e-2)
    assert jnp.allclose(loss_mean, jnp.mean(ref), rtol=1e-3, atol=1e-2)

    # bf16 MXU operands with f32 accumulation (v6e/v7x fast path); the big
    # -log(nll_weights) constant stays in f32 SMEM so bf16 error is tiny.
    loss_bf16 = max_mixture_prior_loss(body_pose, means, precisions, nll_weights,
                                       reduction='none', mxu_dtype=jnp.bfloat16)
    loss_bf16_mean = max_mixture_prior_loss(body_pose, means, precisions, nll_weights,
                                            reduction='mean', mxu_dtype=jnp.bfloat16)
    jax.block_until_ready((loss_bf16, loss_bf16_mean))
    assert jnp.allclose(loss_bf16, ref, rtol=2e-3, atol=0.5)
    assert jnp.allclose(loss_bf16_mean, jnp.mean(ref), rtol=2e-3, atol=0.5)

    # Multi-tile path: exercises grid tiling, batch padding and wrapper reduction.
    B2 = 300
    pose2 = 0.3 * jax.random.normal(k5, (B2, D), dtype=jnp.float32)
    l2_none = max_mixture_prior_loss(pose2, means, precisions, nll_weights,
                                     reduction='none', tile_b=128)
    l2_mean = max_mixture_prior_loss(pose2, means, precisions, nll_weights,
                                     reduction='mean', tile_b=128)
    jax.block_until_ready((l2_none, l2_mean))
    ref2 = _reference_merged_nll(pose2, means, precisions, nll_weights)
    assert l2_none.shape == (B2,)
    assert jnp.allclose(l2_none, ref2, rtol=1e-3, atol=1e-2)
    assert jnp.allclose(l2_mean, jnp.mean(ref2), rtol=1e-3, atol=1e-2)

    print("KERNEL_OK")
</pallas_src>

<mosaic_0001>
module attributes {stable_mosaic.version = 11 : i64} {
  func.func @_mmp_kernel(%arg0: i32, %arg1: memref<8xf32, #tpu.memory_space<smem>>, %arg2: memref<8x128xf32, #tpu.memory_space<vmem>>, %arg3: memref<128x1024xf32, #tpu.memory_space<vmem>>, %arg4: memref<8x1xf32, #tpu.memory_space<vmem>>) attributes {dimension_semantics = [#tpu.dimension_semantics<parallel>], iteration_bounds = array<i64: 1>, scalar_prefetch = 0 : i64, scratch_operands = 0 : i64, tpu.core_type = #tpu.core_type<tc>, window_params = [{transform_indices = @transform_0, window_bounds = array<i64: 8>}, {transform_indices = @transform_1, window_bounds = array<i64: 8, 128>}, {pipeline_mode = #tpu.pipeline_mode<synchronous>, transform_indices = @transform_2, window_bounds = array<i64: 128, 1024>}, {transform_indices = @transform_3, window_bounds = array<i64: 8, 1>}]} {
    %c0 = arith.constant 0 : index
    %c0_0 = arith.constant 0 : index
    %0 = vector.load %arg2[%c0, %c0_0] : memref<8x128xf32, #tpu.memory_space<vmem>>, vector<8x128xf32>
    %c0_1 = arith.constant 0 : index
    %c0_2 = arith.constant 0 : index
    %1 = vector.load %arg3[%c0_1, %c0_2] : memref<128x1024xf32, #tpu.memory_space<vmem>>, vector<128x1024xf32>
    %cst = arith.constant dense<0.000000e+00> : vector<8x1024xf32>
    %2 = tpu.matmul %0, %1, %cst {dimension_numbers = #tpu.dot_dimension_numbers<[1], [0], [0], [1], [0, 0, 1, 1], [], []>} : vector<8x128xf32>, vector<128x1024xf32>, vector<8x1024xf32> -> vector<8x1024xf32>
    %3 = vector.extract_strided_slice %2 {offsets = [0, 0], sizes = [8, 128], strides = [1, 1]} : vector<8x1024xf32> to vector<8x128xf32>
    %4 = arith.mulf %3, %0 : vector<8x128xf32>
    %cst_3 = arith.constant dense<0.000000e+00> : vector<8xf32>
    %5 = vector.multi_reduction <add>, %4, %cst_3 [1] : vector<8x128xf32> to vector<8xf32>
    %6 = vector.shape_cast %5 : vector<8xf32> to vector<8x1xf32>
    %c0_4 = arith.constant 0 : index
    %7 = memref.load %arg1[%c0_4] : memref<8xf32, #tpu.memory_space<smem>>
    %8 = vector.broadcast %7 : f32 to vector<8x1xf32>
    %9 = arith.addf %6, %8 : vector<8x1xf32>
    %10 = vector.extract_strided_slice %2 {offsets = [0, 128], sizes = [8, 128], strides = [1, 1]} : vector<8x1024xf32> to vector<8x128xf32>
    %11 = arith.mulf %10, %0 : vector<8x128xf32>
    %cst_5 = arith.constant dense<0.000000e+00> : vector<8xf32>
    %12 = vector.multi_reduction <add>, %11, %cst_5 [1] : vector<8x128xf32> to vector<8xf32>
    %13 = vector.shape_cast %12 : vector<8xf32> to vector<8x1xf32>
    %c1 = arith.constant 1 : index
    %14 = memref.load %arg1[%c1] : memref<8xf32, #tpu.memory_space<smem>>
    %15 = vector.broadcast %14 : f32 to vector<8x1xf32>
    %16 = arith.addf %13, %15 : vector<8x1xf32>
    %17 = arith.minimumf %9, %16 : vector<8x1xf32>
    %18 = vector.extract_strided_slice %2 {offsets = [0, 256], sizes = [8, 128], strides = [1, 1]} : vector<8x1024xf32> to vector<8x128xf32>
    %19 = arith.mulf %18, %0 : vector<8x128xf32>
    %cst_6 = arith.constant dense<0.000000e+00> : vector<8xf32>
    %20 = vector.multi_reduction <add>, %19, %cst_6 [1] : vector<8x128xf32> to vector<8xf32>
    %21 = vector.shape_cast %20 : vector<8xf32> to vector<8x1xf32>
    %c2 = arith.constant 2 : index
    %22 = memref.load %arg1[%c2] : memref<8xf32, #tpu.memory_space<smem>>
    %23 = vector.broadcast %22 : f32 to vector<8x1xf32>
    %24 = arith.addf %21, %23 : vector<8x1xf32>
    %25 = arith.minimumf %17, %24 : vector<8x1xf32>
    %26 = vector.extract_strided_slice %2 {offsets = [0, 384], sizes = [8, 128], strides = [1, 1]} : vector<8x1024xf32> to vector<8x128xf32>
    %27 = arith.mulf %26, %0 : vector<8x128xf32>
    %cst_7 = arith.constant dense<0.000000e+00> : vector<8xf32>
    %28 = vector.multi_reduction <add>, %27, %cst_7 [1] : vector<8x128xf32> to vector<8xf32>
    %29 = vector.shape_cast %28 : vector<8xf32> to vector<8x1xf32>
    %c3 = arith.constant 3 : index
    %30 = memref.load %arg1[%c3] : memref<8xf32, #tpu.memory_space<smem>>
    %31 = vector.broadcast %30 : f32 to vector<8x1xf32>
    %32 = arith.addf %29, %31 : vector<8x1xf32>
    %33 = arith.minimumf %25, %32 : vector<8x1xf32>
    %34 = vector.extract_strided_slice %2 {offsets = [0, 512], sizes = [8, 128], strides = [1, 1]} : vector<8x1024xf32> to vector<8x128xf32>
    %35 = arith.mulf %34, %0 : vector<8x128xf32>
    %cst_8 = arith.constant dense<0.000000e+00> : vector<8xf32>
    %36 = vector.multi_reduction <add>, %35, %cst_8 [1] : vector<8x128xf32> to vector<8xf32>
    %37 = vector.shape_cast %36 : vector<8xf32> to vector<8x1xf32>
    %c4 = arith.constant 4 : index
    %38 = memref.load %arg1[%c4] : memref<8xf32, #tpu.memory_space<smem>>
    %39 = vector.broadcast %38 : f32 to vector<8x1xf32>
    %40 = arith.addf %37, %39 : vector<8x1xf32>
    %41 = arith.minimumf %33, %40 : vector<8x1xf32>
    %42 = vector.extract_strided_slice %2 {offsets = [0, 640], sizes = [8, 128], strides = [1, 1]} : vector<8x1024xf32> to vector<8x128xf32>
    %43 = arith.mulf %42, %0 : vector<8x128xf32>
    %cst_9 = arith.constant dense<0.000000e+00> : vector<8xf32>
    %44 = vector.multi_reduction <add>, %43, %cst_9 [1] : vector<8x128xf32> to vector<8xf32>
    %45 = vector.shape_cast %44 : vector<8xf32> to vector<8x1xf32>
    %c5 = arith.constant 5 : index
    %46 = memref.load %arg1[%c5] : memref<8xf32, #tpu.memory_space<smem>>
    %47 = vector.broadcast %46 : f32 to vector<8x1xf32>
    %48 = arith.addf %45, %47 : vector<8x1xf32>
    %49 = arith.minimumf %41, %48 : vector<8x1xf32>
    %50 = vector.extract_strided_slice %2 {offsets = [0, 768], sizes = [8, 128], strides = [1, 1]} : vector<8x1024xf32> to vector<8x128xf32>
    %51 = arith.mulf %50, %0 : vector<8x128xf32>
    %cst_10 = arith.constant dense<0.000000e+00> : vector<8xf32>
    %52 = vector.multi_reduction <add>, %51, %cst_10 [1] : vector<8x128xf32> to vector<8xf32>
    %53 = vector.shape_cast %52 : vector<8xf32> to vector<8x1xf32>
    %c6 = arith.constant 6 : index
    %54 = memref.load %arg1[%c6] : memref<8xf32, #tpu.memory_space<smem>>
    %55 = vector.broadcast %54 : f32 to vector<8x1xf32>
    %56 = arith.addf %53, %55 : vector<8x1xf32>
    %57 = arith.minimumf %49, %56 : vector<8x1xf32>
    %58 = vector.extract_strided_slice %2 {offsets = [0, 896], sizes = [8, 128], strides = [1, 1]} : vector<8x1024xf32> to vector<8x128xf32>
    %59 = arith.mulf %58, %0 : vector<8x128xf32>
    %cst_11 = arith.constant dense<0.000000e+00> : vector<8xf32>
    %60 = vector.multi_reduction <add>, %59, %cst_11 [1] : vector<8x128xf32> to vector<8xf32>
    %61 = vector.shape_cast %60 : vector<8xf32> to vector<8x1xf32>
    %c7 = arith.constant 7 : index
    %62 = memref.load %arg1[%c7] : memref<8xf32, #tpu.memory_space<smem>>
    %63 = vector.broadcast %62 : f32 to vector<8x1xf32>
    %64 = arith.addf %61, %63 : vector<8x1xf32>
    %65 = arith.minimumf %57, %64 : vector<8x1xf32>
    %cst_12 = arith.constant 1.000000e+00 : f32
    %66 = vector.broadcast %cst_12 : f32 to vector<8x1xf32>
    %67 = arith.mulf %66, %65 : vector<8x1xf32>
    %c0_13 = arith.constant 0 : index
    %c0_14 = arith.constant 0 : index
    %68 = vector.load %arg4[%c0_13, %c0_14] : memref<8x1xf32, #tpu.memory_space<vmem>>, vector<8x1xf32>
    tpu.vector_store %arg4[%c0_13, %c0_14], %67 {strides = array<i32>} : memref<8x1xf32, #tpu.memory_space<vmem>>, vector<8x1xf32>,
    return
  }
  func.func @transform_0(%arg0: i32) -> i32 {
    %c0_i32 = arith.constant 0 : i32
    %c0_i32_0 = arith.constant 0 : i32
    return %c0_i32 : i32
  }
  func.func @transform_1(%arg0: i32) -> (i32, i32) {
    %c0_i32 = arith.constant 0 : i32
    %c0_i32_0 = arith.constant 0 : i32
    return %arg0, %c0_i32 : i32, i32
  }
  func.func @transform_2(%arg0: i32) -> (i32, i32) {
    %c0_i32 = arith.constant 0 : i32
    %c0_i32_0 = arith.constant 0 : i32
    %c0_i32_1 = arith.constant 0 : i32
    return %c0_i32, %c0_i32_0 : i32, i32
  }
  func.func @transform_3(%arg0: i32) -> (i32, i32) {
    %c0_i32 = arith.constant 0 : i32
    %c0_i32_0 = arith.constant 0 : i32
    return %arg0, %c0_i32 : i32, i32
  }
}

</mosaic_0001>

<llo_original>
// kernel: tpu_custom_call.1
$region0: #{tpu_custom_call.1}
  #allocation0 [shape = 'u32[]', space=smem, size = 0x4, offset = 0x4, fixed_abs, tag = 'smem constant byte address 0x4 - core index']
  #allocation1 [shape = 'u32[144,128]{1,0:T(1,128)}', space=vmem, size = 0x12000, scoped, tag = 'internal scratch']
  %s0 = inlined_call_operand.hbm [shape: f32[8], index: 0, kind: input, shape index: {}]
  %s1 = inlined_call_operand.hbm [shape: f32[8,128], index: 1, kind: input, shape index: {}]
  %s2 = inlined_call_operand.hbm [shape: f32[128,1024], index: 2, kind: input, shape index: {}]
  %s3 = inlined_call_operand.vmem [shape: f32[8,1], index: 3, kind: output, shape index: {}]
  %s4 = sld [smem:[#allocation0]]
  $region34: #{tpu_custom_call.1} parent=0
    _
  %s6 = ssub.s32 1, %s4
  %s7 = scalar_select 0, %s6, %s4
  $region1: #{tpu_custom_call.1} parent=0
    #allocation2 [shape = 'u8[512]{0}', space=smem, size = 0x200, scoped, tag = 'input window, operand 0, single buffered']
    #allocation3 [shape = 's32[1]{0}', space=sflag, size = 0x4, scoped, tag = 'scoped memory for tpu_custom_call.1']
    #allocation4 [shape = 's32[1]{0}', space=sflag, size = 0x4, scoped, tag = 'scoped memory for tpu_custom_call.1']
    #allocation5 [shape = 'u8[4096]{0}', space=vmem, size = 0x1000, scoped, tag = 'input window, operand 1, single buffered']
    #allocation6 [shape = 'u8[524288]{0}', space=vmem, size = 0x80000, scoped, tag = 'input window, operand 2, single buffered']
    #allocation7 [shape = 's32[1]{0}', space=sflag, size = 0x4, scoped, tag = 'scoped memory for tpu_custom_call.1']
    %8 = vsyncpa [#allocation4], 0
    %9 = vsyncpa [#allocation3], 0
    %10 = vsyncpa [#allocation7], 0
    // Predicated region
    $region2: #{tpu_custom_call.1} parent=1 // pred_check
      _
    $region3: #{tpu_custom_call.1} parent=1 // pred_check_branch
      %12 = sbr.rel (0) target = $region5
    $region4: #{tpu_custom_call.1} parent=1 // pred_region
      %s14 = ssub.s32 16, 16
      %15 = vsyncadd [#allocation4], %s14
      %18 = dma.hbm_to_smem %s0, 16, [#allocation2], [#allocation4]
    $region5: #{tpu_custom_call.1} parent=1 // pred_fallthru
      _
    // Predicated region
    $region6: #{tpu_custom_call.1} parent=1 // pred_check
      _
    $region7: #{tpu_custom_call.1} parent=1 // pred_check_branch
      %20 = sbr.rel (0) target = $region9
    $region8: #{tpu_custom_call.1} parent=1 // pred_region
      %s22 = ssub.s32 128, 128
      %23 = vsyncadd [#allocation3], %s22
      %s25 = sshll.u32 [#allocation5], 4
      %s26 = int_to_ptr.vmem [resolvable:$true] %s25
      %28 = dma.hbm_to_vmem [thread:$0]  %s1, 128, %s26, [#allocation3]
    $region9: #{tpu_custom_call.1} parent=1 // pred_fallthru
      _
    // Predicated region
    $region10: #{tpu_custom_call.1} parent=1 // pred_check
      _
    $region11: #{tpu_custom_call.1} parent=1 // pred_check_branch
      %30 = sbr.rel (0) target = $region13
    $region12: #{tpu_custom_call.1} parent=1 // pred_region
      %s32 = ssub.s32 16384, 16384
      %33 = vsyncadd [#allocation7], %s32
      %s34 = sshll.u32 [#allocation6], 4
      %s35 = int_to_ptr.vmem [resolvable:$true] %s34
      %40 = dma.hbm_to_vmem [thread:$0]  %s2, 16384, %s35, [#allocation7], 1024, 1024, 64
    $region13: #{tpu_custom_call.1} parent=1 // pred_fallthru
      _
    // Predicated region
    $region14: #{tpu_custom_call.1} parent=1 // pred_check
      _
    $region15: #{tpu_custom_call.1} parent=1 // pred_check_branch
      %42 = sbr.rel (0) target = $region17
    $region16: #{tpu_custom_call.1} parent=1 // pred_region
      %43 = dma.done [#allocation4], 16
    $region17: #{tpu_custom_call.1} parent=1 // pred_fallthru
      _
    // Predicated region
    $region18: #{tpu_custom_call.1} parent=1 // pred_check
      _
    $region19: #{tpu_custom_call.1} parent=1 // pred_check_branch
      %45 = sbr.rel (0) target = $region21
    $region20: #{tpu_custom_call.1} parent=1 // pred_region
      %46 = dma.done [#allocation3], 128
    $region21: #{tpu_custom_call.1} parent=1 // pred_fallthru
      _
    // Predicated region
    $region22: #{tpu_custom_call.1} parent=1 // pred_check
      _
    $region23: #{tpu_custom_call.1} parent=1 // pred_check_branch
      %48 = sbr.rel (0) target = $region25
    $region24: #{tpu_custom_call.1} parent=1 // pred_region
      %49 = dma.done [#allocation7], 16384
    $region25: #{tpu_custom_call.1} parent=1 // pred_fallthru
      _
    %50 = sfence
    %v51 = vld [vmem:[#allocation5] sm:$0xff]
    %v52 = vld [vmem:[#allocation6] sm:$0xff]
    %v53 = vld [vmem:[#allocation6 + $0x8] sm:$0xff]
    %v54 = vld [vmem:[#allocation6 + $0x10] sm:$0xff]
    %v55 = vld [vmem:[#allocation6 + $0x18] sm:$0xff]
    %v56 = vld [vmem:[#allocation6 + $0x20] sm:$0xff]
    %v57 = vld [vmem:[#allocation6 + $0x28] sm:$0xff]
    %v58 = vld [vmem:[#allocation6 + $0x30] sm:$0xff]
    %v59 = vld [vmem:[#allocation6 + $0x38] sm:$0xff]
    %v60 = vld [vmem:[#allocation6 + $0x40] sm:$0xff]
    %v61 = vld [vmem:[#allocation6 + $0x48] sm:$0xff]
    %v62 = vld [vmem:[#allocation6 + $0x50] sm:$0xff]
    %v63 = vld [vmem:[#allocation6 + $0x58] sm:$0xff]
    %v64 = vld [vmem:[#allocation6 + $0x60] sm:$0xff]
    %v65 = vld [vmem:[#allocation6 + $0x68] sm:$0xff]
    %v66 = vld [vmem:[#allocation6 + $0x70] sm:$0xff]
    %v67 = vld [vmem:[#allocation6 + $0x78] sm:$0xff]
    %v68 = vld [vmem:[#allocation6 + $0x80] sm:$0xff]
    %v69 = vld [vmem:[#allocation6 + $0x88] sm:$0xff]
    %v70 = vld [vmem:[#allocation6 + $0x90] sm:$0xff]
    %v71 = vld [vmem:[#allocation6 + $0x98] sm:$0xff]
    %v72 = vld [vmem:[#allocation6 + $0xa0] sm:$0xff]
    %v73 = vld [vmem:[#allocation6 + $0xa8] sm:$0xff]
    %v74 = vld [vmem:[#allocation6 + $0xb0] sm:$0xff]
    %v75 = vld [vmem:[#allocation6 + $0xb8] sm:$0xff]
    %v76 = vld [vmem:[#allocation6 + $0xc0] sm:$0xff]
    %v77 = vld [vmem:[#allocation6 + $0xc8] sm:$0xff]
    %v78 = vld [vmem:[#allocation6 + $0xd0] sm:$0xff]
    %v79 = vld [vmem:[#allocation6 + $0xd8] sm:$0xff]
    %v80 = vld [vmem:[#allocation6 + $0xe0] sm:$0xff]
    %v81 = vld [vmem:[#allocation6 + $0xe8] sm:$0xff]
    %v82 = vld [vmem:[#allocation6 + $0xf0] sm:$0xff]
    %v83 = vld [vmem:[#allocation6 + $0xf8] sm:$0xff]
    %v84 = vld [vmem:[#allocation6 + $0x100] sm:$0xff]
    %v85 = vld [vmem:[#allocation6 + $0x108] sm:$0xff]
    %v86 = vld [vmem:[#allocation6 + $0x110] sm:$0xff]
    %v87 = vld [vmem:[#allocation6 + $0x118] sm:$0xff]
    %v88 = vld [vmem:[#allocation6 + $0x120] sm:$0xff]
    %v89 = vld [vmem:[#allocation6 + $0x128] sm:$0xff]
    %v90 = vld [vmem:[#allocation6 + $0x130] sm:$0xff]
    %v91 = vld [vmem:[#allocation6 + $0x138] sm:$0xff]
    %v92 = vld [vmem:[#allocation6 + $0x140] sm:$0xff]
    %v93 = vld [vmem:[#allocation6 + $0x148] sm:$0xff]
    %v94 = vld [vmem:[#allocation6 + $0x150] sm:$0xff]
    %v95 = vld [vmem:[#allocation6 + $0x158] sm:$0xff]
    %v96 = vld [vmem:[#allocation6 + $0x160] sm:$0xff]
    %v97 = vld [vmem:[#allocation6 + $0x168] sm:$0xff]
    %v98 = vld [vmem:[#allocation6 + $0x170] sm:$0xff]
    %v99 = vld [vmem:[#allocation6 + $0x178] sm:$0xff]
    %v100 = vld [vmem:[#allocation6 + $0x180] sm:$0xff]
    %v101 = vld [vmem:[#allocation6 + $0x188] sm:$0xff]
    %v102 = vld [vmem:[#allocation6 + $0x190] sm:$0xff]
    %v103 = vld [vmem:[#allocation6 + $0x198] sm:$0xff]
    %v104 = vld [vmem:[#allocation6 + $0x1a0] sm:$0xff]
    %v105 = vld [vmem:[#allocation6 + $0x1a8] sm:$0xff]
    %v106 = vld [vmem:[#allocation6 + $0x1b0] sm:$0xff]
    %v107 = vld [vmem:[#allocation6 + $0x1b8] sm:$0xff]
    %v108 = vld [vmem:[#allocation6 + $0x1c0] sm:$0xff]
    %v109 = vld [vmem:[#allocation6 + $0x1c8] sm:$0xff]
    %v110 = vld [vmem:[#allocation6 + $0x1d0] sm:$0xff]
    %v111 = vld [vmem:[#allocation6 + $0x1d8] sm:$0xff]
    %v112 = vld [vmem:[#allocation6 + $0x1e0] sm:$0xff]
    %v113 = vld [vmem:[#allocation6 + $0x1e8] sm:$0xff]
    %v114 = vld [vmem:[#allocation6 + $0x1f0] sm:$0xff]
    %v115 = vld [vmem:[#allocation6 + $0x1f8] sm:$0xff]
    %v116 = vld [vmem:[#allocation6 + $0x200] sm:$0xff]
    %v117 = vld [vmem:[#allocation6 + $0x208] sm:$0xff]
    %v118 = vld [vmem:[#allocation6 + $0x210] sm:$0xff]
    %v119 = vld [vmem:[#allocation6 + $0x218] sm:$0xff]
    %v120 = vld [vmem:[#allocation6 + $0x220] sm:$0xff]
    %v121 = vld [vmem:[#allocation6 + $0x228] sm:$0xff]
    %v122 = vld [vmem:[#allocation6 + $0x230] sm:$0xff]
    %v123 = vld [vmem:[#allocation6 + $0x238] sm:$0xff]
    %v124 = vld [vmem:[#allocation6 + $0x240] sm:$0xff]
    %v125 = vld [vmem:[#allocation6 + $0x248] sm:$0xff]
    %v126 = vld [vmem:[#allocation6 + $0x250] sm:$0xff]
    %v127 = vld [vmem:[#allocation6 + $0x258] sm:$0xff]
    %v128 = vld [vmem:[#allocation6 + $0x260] sm:$0xff]
    %v129 = vld [vmem:[#allocation6 + $0x268] sm:$0xff]
    %v130 = vld [vmem:[#allocation6 + $0x270] sm:$0xff]
    %v131 = vld [vmem:[#allocation6 + $0x278] sm:$0xff]
    %v132 = vld [vmem:[#allocation6 + $0x280] sm:$0xff]
    %v133 = vld [vmem:[#allocation6 + $0x288] sm:$0xff]
    %v134 = vld [vmem:[#allocation6 + $0x290] sm:$0xff]
    %v135 = vld [vmem:[#allocation6 + $0x298] sm:$0xff]
    %v136 = vld [vmem:[#allocation6 + $0x2a0] sm:$0xff]
    %v137 = vld [vmem:[#allocation6 + $0x2a8] sm:$0xff]
    %v138 = vld [vmem:[#allocation6 + $0x2b0] sm:$0xff]
    %v139 = vld [vmem:[#allocation6 + $0x2b8] sm:$0xff]
    %v140 = vld [vmem:[#allocation6 + $0x2c0] sm:$0xff]
    %v141 = vld [vmem:[#allocation6 + $0x2c8] sm:$0xff]
    %v142 = vld [vmem:[#allocation6 + $0x2d0] sm:$0xff]
    %v143 = vld [vmem:[#allocation6 + $0x2d8] sm:$0xff]
    %v144 = vld [vmem:[#allocation6 + $0x2e0] sm:$0xff]
    %v145 = vld [vmem:[#allocation6 + $0x2e8] sm:$0xff]
    %v146 = vld [vmem:[#allocation6 + $0x2f0] sm:$0xff]
    %v147 = vld [vmem:[#allocation6 + $0x2f8] sm:$0xff]
    %v148 = vld [vmem:[#allocation6 + $0x300] sm:$0xff]
    %v149 = vld [vmem:[#allocation6 + $0x308] sm:$0xff]
    %v150 = vld [vmem:[#allocation6 + $0x310] sm:$0xff]
    %v151 = vld [vmem:[#allocation6 + $0x318] sm:$0xff]
    %v152 = vld [vmem:[#allocation6 + $0x320] sm:$0xff]
    %v153 = vld [vmem:[#allocation6 + $0x328] sm:$0xff]
    %v154 = vld [vmem:[#allocation6 + $0x330] sm:$0xff]
    %v155 = vld [vmem:[#allocation6 + $0x338] sm:$0xff]
    %v156 = vld [vmem:[#allocation6 + $0x340] sm:$0xff]
    %v157 = vld [vmem:[#allocation6 + $0x348] sm:$0xff]
    %v158 = vld [vmem:[#allocation6 + $0x350] sm:$0xff]
    %v159 = vld [vmem:[#allocation6 + $0x358] sm:$0xff]
    %v160 = vld [vmem:[#allocation6 + $0x360] sm:$0xff]
    %v161 = vld [vmem:[#allocation6 + $0x368] sm:$0xff]
    %v162 = vld [vmem:[#allocation6 + $0x370] sm:$0xff]
    %v163 = vld [vmem:[#allocation6 + $0x378] sm:$0xff]
    %v164 = vld [vmem:[#allocation6 + $0x380] sm:$0xff]
    %v165 = vld [vmem:[#allocation6 + $0x388] sm:$0xff]
    %v166 = vld [vmem:[#allocation6 + $0x390] sm:$0xff]
    %v167 = vld [vmem:[#allocation6 + $0x398] sm:$0xff]
    %v168 = vld [vmem:[#allocation6 + $0x3a0] sm:$0xff]
    %v169 = vld [vmem:[#allocation6 + $0x3a8] sm:$0xff]
    %v170 = vld [vmem:[#allocation6 + $0x3b0] sm:$0xff]
    %v171 = vld [vmem:[#allocation6 + $0x3b8] sm:$0xff]
    %v172 = vld [vmem:[#allocation6 + $0x3c0] sm:$0xff]
    %v173 = vld [vmem:[#allocation6 + $0x3c8] sm:$0xff]
    %v174 = vld [vmem:[#allocation6 + $0x3d0] sm:$0xff]
    %v175 = vld [vmem:[#allocation6 + $0x3d8] sm:$0xff]
    %v176 = vld [vmem:[#allocation6 + $0x3e0] sm:$0xff]
    %v177 = vld [vmem:[#allocation6 + $0x3e8] sm:$0xff]
    %v178 = vld [vmem:[#allocation6 + $0x3f0] sm:$0xff]
    %v179 = vld [vmem:[#allocation6 + $0x3f8] sm:$0xff]
    %180 = vmatprep.subr.mxu0 %v53
    %181 = vmatpush1.msra.mxu0 %v52
    %182 = vmatprep.subr.mxu0 %v61
    %183 = vmatpush1.msra.mxu0 %v60
    %184 = vmatprep.subr.mxu0 %v69
    %185 = vmatpush1.msra.mxu0 %v68
    %186 = vmatprep.subr.mxu0 %v77
    %187 = vmatpush1.msra.mxu0 %v76
    %188 = vmatprep.subr.mxu0 %v85
    %189 = vmatpush1.msra.mxu0 %v84
    %190 = vmatprep.subr.mxu0 %v93
    %191 = vmatpush1.msra.mxu0 %v92
    %192 = vmatprep.subr.mxu0 %v101
    %193 = vmatpush1.msra.mxu0 %v100
    %194 = vmatprep.subr.mxu0 %v109
    %195 = vmatpush1.msra.mxu0 %v108
    %196 = vmatprep.subr.mxu0 %v117
    %197 = vmatpush1.msra.mxu0 %v116
    %198 = vmatprep.subr.mxu0 %v125
    %199 = vmatpush1.msra.mxu0 %v124
    %200 = vmatprep.subr.mxu0 %v133
    %201 = vmatpush1.msra.mxu0 %v132
    %202 = vmatprep.subr.mxu0 %v141
    %203 = vmatpush1.msra.mxu0 %v140
    %204 = vmatprep.subr.mxu0 %v149
    %205 = vmatpush1.msra.mxu0 %v148
    %206 = vmatprep.subr.mxu0 %v157
    %207 = vmatpush1.msra.mxu0 %v156
    %208 = vmatprep.subr.mxu0 %v165
    %209 = vmatpush1.msra.mxu0 %v164
    %210 = vmatprep.subr.mxu0 %v173
    %211 = vmatpush1.msra.mxu0 %v172
    %212 = vmatprep.subr.mxu0 0.0
    %213 = vmatpush1.msra.mxu0 0.0
    %214 = vmatprep.subr.mxu0 0.0
    %215 = vmatpush1.msra.mxu0 0.0
    %216 = vmatprep.subr.mxu0 0.0
    %217 = vmatpush1.msra.mxu0 0.0
    %218 = vmatprep.subr.mxu0 0.0
    %219 = vmatpush1.msra.mxu0 0.0
    %220 = vmatprep.subr.mxu0 0.0
    %221 = vmatpush1.msra.mxu0 0.0
    %222 = vmatprep.subr.mxu0 0.0
    %223 = vmatpush1.msra.mxu0 0.0
    %224 = vmatprep.subr.mxu0 0.0
    %225 = vmatpush1.msra.mxu0 0.0
    %226 = vmatprep.subr.mxu0 0.0
    %227 = vmatpush1.msra.mxu0 0.0
    %228 = vmatprep.subr.mxu0 0.0
    %229 = vmatpush1.msra.mxu0 0.0
    %230 = vmatprep.subr.mxu0 0.0
    %231 = vmatpush1.msra.mxu0 0.0
    %232 = vmatprep.subr.mxu0 0.0
    %233 = vmatpush1.msra.mxu0 0.0
    %234 = vmatprep.subr.mxu0 0.0
    %235 = vmatpush1.msra.mxu0 0.0
    %236 = vmatprep.subr.mxu0 0.0
    %237 = vmatpush1.msra.mxu0 0.0
    %238 = vmatprep.subr.mxu0 0.0
    %239 = vmatpush1.msra.mxu0 0.0
    %240 = vmatprep.subr.mxu0 0.0
    %241 = vmatpush1.msra.mxu0 0.0
    %242 = vmatprep.subr.mxu0 0.0
    %243 = vmatpush1.msra.mxu0 0.0
    %244 = vmatprep.mubr.f32.mxu0 0.0
    %245 = vmatmul.mubr.f32.gmra.mrb[0].mxu0 %v51
    %v246 = vpop.f32.mrb[0].mxu0
    %v247 = vadd.f32 0.0, %v246
    %v248 = vpop.f32.mrb[0].mxu0
    %v249 = vadd.f32 0.0, %v248
    %250 = vdwg.mxu0
    %251 = vmatprep.subr.mxu0 %v55
    %252 = vmatpush1.msra.mxu0 %v54
    %253 = vmatprep.subr.mxu0 %v63
    %254 = vmatpush1.msra.mxu0 %v62
    %255 = vmatprep.subr.mxu0 %v71
    %256 = vmatpush1.msra.mxu0 %v70
    %257 = vmatprep.subr.mxu0 %v79
    %258 = vmatpush1.msra.mxu0 %v78
    %259 = vmatprep.subr.mxu0 %v87
    %260 = vmatpush1.msra.mxu0 %v86
    %261 = vmatprep.subr.mxu0 %v95
    %262 = vmatpush1.msra.mxu0 %v94
    %263 = vmatprep.subr.mxu0 %v103
    %264 = vmatpush1.msra.mxu0 %v102
    %265 = vmatprep.subr.mxu0 %v111
    %266 = vmatpush1.msra.mxu0 %v110
    %267 = vmatprep.subr.mxu0 %v119
    %268 = vmatpush1.msra.mxu0 %v118
    %269 = vmatprep.subr.mxu0 %v127
    %270 = vmatpush1.msra.mxu0 %v126
    %271 = vmatprep.subr.mxu0 %v135
    %272 = vmatpush1.msra.mxu0 %v134
    %273 = vmatprep.subr.mxu0 %v143
    %274 = vmatpush1.msra.mxu0 %v142
    %275 = vmatprep.subr.mxu0 %v151
    %276 = vmatpush1.msra.mxu0 %v150
    %277 = vmatprep.subr.mxu0 %v159
    %278 = vmatpush1.msra.mxu0 %v158
    %279 = vmatprep.subr.mxu0 %v167
    %280 = vmatpush1.msra.mxu0 %v166
    %281 = vmatprep.subr.mxu0 %v175
    %282 = vmatpush1.msra.mxu0 %v174
    %283 = vmatprep.subr.mxu0 0.0
    %284 = vmatpush1.msra.mxu0 0.0
    %285 = vmatprep.subr.mxu0 0.0
    %286 = vmatpush1.msra.mxu0 0.0
    %287 = vmatprep.subr.mxu0 0.0
    %288 = vmatpush1.msra.mxu0 0.0
    %289 = vmatprep.subr.mxu0 0.0
    %290 = vmatpush1.msra.mxu0 0.0
    %291 = vmatprep.subr.mxu0 0.0
    %292 = vmatpush1.msra.mxu0 0.0
    %293 = vmatprep.subr.mxu0 0.0
    %294 = vmatpush1.msra.mxu0 0.0
    %295 = vmatprep.subr.mxu0 0.0
    %296 = vmatpush1.msra.mxu0 0.0
    %297 = vmatprep.subr.mxu0 0.0
    %298 = vmatpush1.msra.mxu0 0.0
    %299 = vmatprep.subr.mxu0 0.0
    %300 = vmatpush1.msra.mxu0 0.0
    %301 = vmatprep.subr.mxu0 0.0
    %302 = vmatpush1.msra.mxu0 0.0
    %303 = vmatprep.subr.mxu0 0.0
    %304 = vmatpush1.msra.mxu0 0.0
    %305 = vmatprep.subr.mxu0 0.0
    %306 = vmatpush1.msra.mxu0 0.0
    %307 = vmatprep.subr.mxu0 0.0
    %308 = vmatpush1.msra.mxu0 0.0
    %309 = vmatprep.subr.mxu0 0.0
    %310 = vmatpush1.msra.mxu0 0.0
    %311 = vmatprep.subr.mxu0 0.0
    %312 = vmatpush1.msra.mxu0 0.0
    %313 = vmatprep.subr.mxu0 0.0
    %314 = vmatpush1.msra.mxu0 0.0
    %315 = vmatprep.mubr.f32.mxu0 0.0
    %316 = vmatmul.mubr.f32.gmra.mrb[0].mxu0 %v51
    %v317 = vpop.f32.mrb[0].mxu0
    %v318 = vadd.f32 0.0, %v317
    %v319 = vpop.f32.mrb[0].mxu0
    %v320 = vadd.f32 0.0, %v319
    %321 = vdwg.mxu0
    %322 = vmatprep.subr.mxu0 %v57
    %323 = vmatpush1.msra.mxu0 %v56
    %324 = vmatprep.subr.mxu0 %v65
    %325 = vmatpush1.msra.mxu0 %v64
    %326 = vmatprep.subr.mxu0 %v73
    %327 = vmatpush1.msra.mxu0 %v72
    %328 = vmatprep.subr.mxu0 %v81
    %329 = vmatpush1.msra.mxu0 %v80
    %330 = vmatprep.subr.mxu0 %v89
    %331 = vmatpush1.msra.mxu0 %v88
    %332 = vmatprep.subr.mxu0 %v97
    %333 = vmatpush1.msra.mxu0 %v96
    %334 = vmatprep.subr.mxu0 %v105
    %335 = vmatpush1.msra.mxu0 %v104
    %336 = vmatprep.subr.mxu0 %v113
    %337 = vmatpush1.msra.mxu0 %v112
    %338 = vmatprep.subr.mxu0 %v121
    %339 = vmatpush1.msra.mxu0 %v120
    %340 = vmatprep.subr.mxu0 %v129
    %341 = vmatpush1.msra.mxu0 %v128
    %342 = vmatprep.subr.mxu0 %v137
    %343 = vmatpush1.msra.mxu0 %v136
    %344 = vmatprep.subr.mxu0 %v145
    %345 = vmatpush1.msra.mxu0 %v144
    %346 = vmatprep.subr.mxu0 %v153
    %347 = vmatpush1.msra.mxu0 %v152
    %348 = vmatprep.subr.mxu0 %v161
    %349 = vmatpush1.msra.mxu0 %v160
    %350 = vmatprep.subr.mxu0 %v169
    %351 = vmatpush1.msra.mxu0 %v168
    %352 = vmatprep.subr.mxu0 %v177
    %353 = vmatpush1.msra.mxu0 %v176
    %354 = vmatprep.subr.mxu0 0.0
    %355 = vmatpush1.msra.mxu0 0.0
    %356 = vmatprep.subr.mxu0 0.0
    %357 = vmatpush1.msra.mxu0 0.0
    %358 = vmatprep.subr.mxu0 0.0
    %359 = vmatpush1.msra.mxu0 0.0
    %360 = vmatprep.subr.mxu0 0.0
    %361 = vmatpush1.msra.mxu0 0.0
    %362 = vmatprep.subr.mxu0 0.0
    %363 = vmatpush1.msra.mxu0 0.0
    %364 = vmatprep.subr.mxu0 0.0
    %365 = vmatpush1.msra.mxu0 0.0
    %366 = vmatprep.subr.mxu0 0.0
    %367 = vmatpush1.msra.mxu0 0.0
    %368 = vmatprep.subr.mxu0 0.0
    %369 = vmatpush1.msra.mxu0 0.0
    %370 = vmatprep.subr.mxu0 0.0
    %371 = vmatpush1.msra.mxu0 0.0
    %372 = vmatprep.subr.mxu0 0.0
    %373 = vmatpush1.msra.mxu0 0.0
    %374 = vmatprep.subr.mxu0 0.0
    %375 = vmatpush1.msra.mxu0 0.0
    %376 = vmatprep.subr.mxu0 0.0
    %377 = vmatpush1.msra.mxu0 0.0
    %378 = vmatprep.subr.mxu0 0.0
    %379 = vmatpush1.msra.mxu0 0.0
    %380 = vmatprep.subr.mxu0 0.0
    %381 = vmatpush1.msra.mxu0 0.0
    %382 = vmatprep.subr.mxu0 0.0
    %383 = vmatpush1.msra.mxu0 0.0
    %384 = vmatprep.subr.mxu0 0.0
    %385 = vmatpush1.msra.mxu0 0.0
    %386 = vmatprep.mubr.f32.mxu0 0.0
    %387 = vmatmul.mubr.f32.gmra.mrb[0].mxu0 %v51
    %v388 = vpop.f32.mrb[0].mxu0
    %v389 = vadd.f32 0.0, %v388
    %v390 = vpop.f32.mrb[0].mxu0
    %v391 = vadd.f32 0.0, %v390
    %392 = vdwg.mxu0
    %393 = vmatprep.subr.mxu0 %v59
    %394 = vmatpush1.msra.mxu0 %v58
    %395 = vmatprep.subr.mxu0 %v67
    %396 = vmatpush1.msra.mxu0 %v66
    %397 = vmatprep.subr.mxu0 %v75
    %398 = vmatpush1.msra.mxu0 %v74
    %399 = vmatprep.subr.mxu0 %v83
    %400 = vmatpush1.msra.mxu0 %v82
    %401 = vmatprep.subr.mxu0 %v91
    %402 = vmatpush1.msra.mxu0 %v90
    %403 = vmatprep.subr.mxu0 %v99
    %404 = vmatpush1.msra.mxu0 %v98
    %405 = vmatprep.subr.mxu0 %v107
    %406 = vmatpush1.msra.mxu0 %v106
    %407 = vmatprep.subr.mxu0 %v115
    %408 = vmatpush1.msra.mxu0 %v114
    %409 = vmatprep.subr.mxu0 %v123
    %410 = vmatpush1.msra.mxu0 %v122
    %411 = vmatprep.subr.mxu0 %v131
    %412 = vmatpush1.msra.mxu0 %v130
    %413 = vmatprep.subr.mxu0 %v139
    %414 = vmatpush1.msra.mxu0 %v138
    %415 = vmatprep.subr.mxu0 %v147
    %416 = vmatpush1.msra.mxu0 %v146
    %417 = vmatprep.subr.mxu0 %v155
    %418 = vmatpush1.msra.mxu0 %v154
    %419 = vmatprep.subr.mxu0 %v163
    %420 = vmatpush1.msra.mxu0 %v162
    %421 = vmatprep.subr.mxu0 %v171
    %422 = vmatpush1.msra.mxu0 %v170
    %423 = vmatprep.subr.mxu0 %v179
    %424 = vmatpush1.msra.mxu0 %v178
    %425 = vmatprep.subr.mxu0 0.0
    %426 = vmatpush1.msra.mxu0 0.0
    %427 = vmatprep.subr.mxu0 0.0
    %428 = vmatpush1.msra.mxu0 0.0
    %429 = vmatprep.subr.mxu0 0.0
    %430 = vmatpush1.msra.mxu0 0.0
    %431 = vmatprep.subr.mxu0 0.0
    %432 = vmatpush1.msra.mxu0 0.0
    %433 = vmatprep.subr.mxu0 0.0
    %434 = vmatpush1.msra.mxu0 0.0
    %435 = vmatprep.subr.mxu0 0.0
    %436 = vmatpush1.msra.mxu0 0.0
    %437 = vmatprep.subr.mxu0 0.0
    %438 = vmatpush1.msra.mxu0 0.0
    %439 = vmatprep.subr.mxu0 0.0
    %440 = vmatpush1.msra.mxu0 0.0
    %441 = vmatprep.subr.mxu0 0.0
    %442 = vmatpush1.msra.mxu0 0.0
    %443 = vmatprep.subr.mxu0 0.0
    %444 = vmatpush1.msra.mxu0 0.0
    %445 = vmatprep.subr.mxu0 0.0
    %446 = vmatpush1.msra.mxu0 0.0
    %447 = vmatprep.subr.mxu0 0.0
    %448 = vmatpush1.msra.mxu0 0.0
    %449 = vmatprep.subr.mxu0 0.0
    %450 = vmatpush1.msra.mxu0 0.0
    %451 = vmatprep.subr.mxu0 0.0
    %452 = vmatpush1.msra.mxu0 0.0
    %453 = vmatprep.subr.mxu0 0.0
    %454 = vmatpush1.msra.mxu0 0.0
    %455 = vmatprep.subr.mxu0 0.0
    %456 = vmatpush1.msra.mxu0 0.0
    %457 = vmatprep.mubr.f32.mxu0 0.0
    %458 = vmatmul.mubr.f32.gmra.mrb[0].mxu0 %v51
    %v459 = vpop.f32.mrb[0].mxu0
    %v460 = vadd.f32 0.0, %v459
    %v461 = vpop.f32.mrb[0].mxu0
    %v462 = vadd.f32 0.0, %v461
    %463 = vdwg.mxu0
    %v464 = vmul.f32 %v247, %v51
    %465 = vadd.xlane.f32.xlu0 %v464
    %v466 = vpop.xlane.xlu0 %465
    %s467 = sld [smem:[#allocation2]]
    %v468 = vstv %s467
    %v469 = vadd.f32 %v466, %v468
    %v470 = vmul.f32 %v249, %v51
    %471 = vadd.xlane.f32.xlu0 %v470
    %v472 = vpop.xlane.xlu0 %471
    %s473 = sld [smem:[#allocation2 + $0x1]]
    %v474 = vstv %s473
    %v475 = vadd.f32 %v472, %v474
    %v476 = vmin.f32 %v469, %v475
    %v477 = vmul.f32 %v318, %v51
    %478 = vadd.xlane.f32.xlu0 %v477
    %v479 = vpop.xlane.xlu0 %478
    %s480 = sld [smem:[#allocation2 + $0x2]]
    %v481 = vstv %s480
    %v482 = vadd.f32 %v479, %v481
    %v483 = vmin.f32 %v476, %v482
    %v484 = vmul.f32 %v320, %v51
    %485 = vadd.xlane.f32.xlu0 %v484
    %v486 = vpop.xlane.xlu0 %485
    %s487 = sld [smem:[#allocation2 + $0x3]]
    %v488 = vstv %s487
    %v489 = vadd.f32 %v486, %v488
    %v490 = vmin.f32 %v483, %v489
    %v491 = vmul.f32 %v389, %v51
    %492 = vadd.xlane.f32.xlu0 %v491
    %v493 = vpop.xlane.xlu0 %492
    %s494 = sld [smem:[#allocation2 + $0x4]]
    %v495 = vstv %s494
    %v496 = vadd.f32 %v493, %v495
    %v497 = vmin.f32 %v490, %v496
    %v498 = vmul.f32 %v391, %v51
    %499 = vadd.xlane.f32.xlu0 %v498
    %v500 = vpop.xlane.xlu0 %499
    %s501 = sld [smem:[#allocation2 + $0x5]]
    %v502 = vstv %s501
    %v503 = vadd.f32 %v500, %v502
    %v504 = vmin.f32 %v497, %v503
    %v505 = vmul.f32 %v460, %v51
    %506 = vadd.xlane.f32.xlu0 %v505
    %v507 = vpop.xlane.xlu0 %506
    %s508 = sld [smem:[#allocation2 + $0x6]]
    %v509 = vstv %s508
    %v510 = vadd.f32 %v507, %v509
    %v511 = vmin.f32 %v504, %v510
    %v512 = vmul.f32 %v462, %v51
    %513 = vadd.xlane.f32.xlu0 %v512
    %v514 = vpop.xlane.xlu0 %513
    %s515 = sld [smem:[#allocation2 + $0x7]]
    %v516 = vstv %s515
    %v517 = vadd.f32 %v514, %v516
    %v518 = vmin.f32 %v511, %v517
    %vm519 = vcmask 7168
    %520 = vst.msk [vmem:[%s3] sm:$0xff] %vm519, %v518
    // Predicated region
    $region26: #{tpu_custom_call.1} parent=1 // pred_check
      _
    $region27: #{tpu_custom_call.1} parent=1 // pred_check_branch
      %522 = sbr.rel (0) target = $region29
    $region28: #{tpu_custom_call.1} parent=1 // pred_region
      _
    $region29: #{tpu_custom_call.1} parent=1 // pred_fallthru
      _
    // Predicated region
    $region30: #{tpu_custom_call.1} parent=1 // pred_check
      _
    $region31: #{tpu_custom_call.1} parent=1 // pred_check_branch
      %524 = sbr.rel (0) target = $region33
    $region32: #{tpu_custom_call.1} parent=1 // pred_region
      _
    $region33: #{tpu_custom_call.1} parent=1 // pred_fallthru
      _
    %525 = vsyncpa [#allocation3], 1
    %526 = vsyncpa [#allocation7], 1
    %527 = vsyncpa [#allocation4], 1

</llo_original>
